<compile_context>
chip_gen: v7x
topology: tpu7x:2x2x1
jax: 0.10.0
libtpu: 0.0.40
codegen_flags: <defaults>
</compile_context>

<pallas_src>
import functools
import math

import jax
import jax.numpy as jnp
from jax.experimental import pallas as pl
from jax.experimental.pallas import tpu as pltpu


_VMEM_LIMIT = 64 * 1024 * 1024  # tiles are sized to stay well under v7x's 64 MiB VMEM


# ----------------------------------------------------------------------------
# tiling helpers
# ----------------------------------------------------------------------------
def _pick_tile(dim, pref, quantum):
    """Tile that divides `dim` and is either a multiple of `quantum` or the full dim."""
    assert pref % quantum == 0
    if dim <= pref:
        return dim
    for cand in range(pref, 0, -quantum):
        if dim % cand == 0:
            return cand
    return dim


def _divisor_tile(dim, pref):
    """Largest divisor of `dim` that is <= pref (used on leading/batch axes only)."""
    pref = max(1, min(dim, pref))
    for cand in range(pref, 0, -1):
        if dim % cand == 0:
            return cand
    return 1


# ----------------------------------------------------------------------------
# Tiled matmul + bias (used for the LSTM input projections)
# ----------------------------------------------------------------------------
def _matmul_bias_kernel(x_ref, w_ref, b_ref, o_ref, acc_ref, *, activation, n_k):
    k = pl.program_id(2)

    @pl.when(k == 0)
    def _():
        acc_ref[...] = jnp.zeros_like(acc_ref)

    acc_ref[...] += jnp.dot(x_ref[...], w_ref[...],
                            preferred_element_type=jnp.float32)

    @pl.when(k == n_k - 1)
    def _():
        y = acc_ref[...] + b_ref[...]
        if activation == "relu":
            y = jnp.maximum(y, 0.0)
        o_ref[...] = y.astype(o_ref.dtype)


def matmul_bias(x, w, b, activation=None, compute_dtype=jnp.float32):
    """y = x @ w + b, tiled over (M, N, K) with an fp32 VMEM accumulator."""
    M, K = x.shape
    _, N = w.shape
    tm = _pick_tile(M, 256, 8)
    tn = _pick_tile(N, 256, 128)
    tk = _pick_tile(K, 512, 128)
    n_k = K // tk
    b2 = jnp.asarray(b, jnp.float32).reshape(1, N)
    return pl.pallas_call(
        functools.partial(_matmul_bias_kernel, activation=activation, n_k=n_k),
        grid=(M // tm, N // tn, n_k),
        in_specs=[pl.BlockSpec((tm, tk), lambda i, j, k: (i, k)),
                  pl.BlockSpec((tk, tn), lambda i, j, k: (k, j)),
                  pl.BlockSpec((1, tn), lambda i, j, k: (0, j))],
        out_specs=pl.BlockSpec((tm, tn), lambda i, j, k: (i, j)),
        out_shape=jax.ShapeDtypeStruct((M, N), jnp.float32),
        scratch_shapes=[pltpu.VMEM((tm, tn), jnp.float32)],
        compiler_params=pltpu.CompilerParams(
            dimension_semantics=("parallel", "parallel", "arbitrary"),
            vmem_limit_bytes=_VMEM_LIMIT),
    )(x.astype(compute_dtype), w.astype(compute_dtype), b2)


# ----------------------------------------------------------------------------
# Bidirectional LSTM: both directions per grid step, time reversal via index_map
# ----------------------------------------------------------------------------
def _bilstm_kernel(xpf_ref, xpb_ref, whf_ref, whb_ref, of_ref, ob_ref,
                   hf, cf, hb, cb, *, H):
    t = pl.program_id(0)

    @pl.when(t == 0)
    def _():
        hf[...] = jnp.zeros_like(hf)
        cf[...] = jnp.zeros_like(cf)
        hb[...] = jnp.zeros_like(hb)
        cb[...] = jnp.zeros_like(cb)

    def cell(xp, h_ref, c_ref, w_ref):
        # gates = x_t @ W_ih^T + (b_ih + b_hh)  [precomputed]  +  h_{t-1} @ W_hh^T
        gates = xp + jnp.dot(h_ref[...], w_ref[...],
                             preferred_element_type=jnp.float32)
        i_g = jax.nn.sigmoid(gates[:, 0 * H:1 * H])
        f_g = jax.nn.sigmoid(gates[:, 1 * H:2 * H])
        g_g = jnp.tanh(gates[:, 2 * H:3 * H])
        o_g = jax.nn.sigmoid(gates[:, 3 * H:4 * H])
        c_new = f_g * c_ref[...] + i_g * g_g
        h_new = o_g * jnp.tanh(c_new)
        c_ref[...] = c_new
        h_ref[...] = h_new
        return h_new

    of_ref[0] = cell(xpf_ref[0], hf, cf, whf_ref)
    ob_ref[0] = cell(xpb_ref[0], hb, cb, whb_ref)


def bilstm(xp_f, xp_b, w_hh_f_t, w_hh_b_t, H):
    """xp_f/xp_b: (T, B, 4H) precomputed input projections (time-major).
    Returns (h_fwd, h_bwd), each (T, B, H), already time-aligned."""
    T, B, _ = xp_f.shape
    return pl.pallas_call(
        functools.partial(_bilstm_kernel, H=H),
        grid=(T,),
        in_specs=[pl.BlockSpec((1, B, 4 * H), lambda t: (t, 0, 0)),
                  pl.BlockSpec((1, B, 4 * H), lambda t: (T - 1 - t, 0, 0)),
                  pl.BlockSpec((H, 4 * H), lambda t: (0, 0)),
                  pl.BlockSpec((H, 4 * H), lambda t: (0, 0))],
        out_specs=(pl.BlockSpec((1, B, H), lambda t: (t, 0, 0)),
                   pl.BlockSpec((1, B, H), lambda t: (T - 1 - t, 0, 0))),
        out_shape=(jax.ShapeDtypeStruct((T, B, H), jnp.float32),
                   jax.ShapeDtypeStruct((T, B, H), jnp.float32)),
        scratch_shapes=[pltpu.VMEM((B, H), jnp.float32)] * 4,
        compiler_params=pltpu.CompilerParams(
            dimension_semantics=("arbitrary",)),
    )(xp_f, xp_b, w_hh_f_t, w_hh_b_t)


# ----------------------------------------------------------------------------
# Fused transformer sub-blocks
# ----------------------------------------------------------------------------
def _mha_layer_kernel(y_ref, wqkv_ref, bqkv_ref, wo_ref, bo_ref, g_ref, beta_ref,
                      o_ref, *, nhead, dh, scale, eps):
    tt, B, E = y_ref.shape
    y3 = y_ref[...]                                   # (tt, B, E) fp32
    y2 = y3.reshape(tt * B, E)

    # QKV projection (bf16 MXU, fp32 accumulate)
    qkv = jnp.dot(y2.astype(jnp.bfloat16), wqkv_ref[...],
                  preferred_element_type=jnp.float32) + bqkv_ref[...]
    qkv = qkv.reshape(tt, B, 3 * E)

    heads = []
    for h in range(nhead):
        q = qkv[:, :, h * dh:(h + 1) * dh].astype(jnp.bfloat16)
        k = qkv[:, :, E + h * dh:E + (h + 1) * dh].astype(jnp.bfloat16)
        v = qkv[:, :, 2 * E + h * dh:2 * E + (h + 1) * dh].astype(jnp.bfloat16)
        s = jnp.einsum('tqd,tkd->tqk', q, k,
                       preferred_element_type=jnp.float32) * scale
        s = s - jnp.max(s, axis=-1, keepdims=True)
        p = jnp.exp(s)                                 # fp32 softmax
        p = p * pl.reciprocal(jnp.sum(p, axis=-1, keepdims=True), approx=True)
        heads.append(jnp.einsum('tqk,tkd->tqd', p.astype(jnp.bfloat16), v,
                                preferred_element_type=jnp.float32))
    ctx = jnp.concatenate(heads, axis=-1).reshape(tt * B, E)

    # out-projection + residual + LayerNorm1 (post-norm, eps=1e-5)
    attn = jnp.dot(ctx.astype(jnp.bfloat16), wo_ref[...],
                   preferred_element_type=jnp.float32) + bo_ref[...]
    x = y2 + attn
    mean = jnp.mean(x, axis=-1, keepdims=True)
    xc = x - mean
    var = jnp.mean(xc * xc, axis=-1, keepdims=True)
    out = xc * jax.lax.rsqrt(var + eps) * g_ref[...] + beta_ref[...]
    o_ref[...] = out.reshape(tt, B, E).astype(o_ref.dtype)


def mha_layer(y, layer, *, nhead, dh, scale, eps=1e-5):
    """Fused QKV-proj + MHA (attention over B, batched over time/head) + out-proj +
    residual + LayerNorm1. y: (T, B, E) time-major."""
    T, B, E = y.shape
    tt = _divisor_tile(T, max(1, 512 // max(B, 1)))   # time-tile: pipelined over T
    wqkv = layer["in_proj_w"].T.astype(jnp.bfloat16)             # (E, 3E)
    bqkv = layer["in_proj_b"].reshape(1, 3 * E).astype(jnp.float32)
    wo = layer["out_proj_w"].T.astype(jnp.bfloat16)              # (E, E)
    bo = layer["out_proj_b"].reshape(1, E).astype(jnp.float32)
    g = layer["norm1_g"].reshape(1, E).astype(jnp.float32)
    beta = layer["norm1_b"].reshape(1, E).astype(jnp.float32)
    return pl.pallas_call(
        functools.partial(_mha_layer_kernel, nhead=nhead, dh=dh,
                          scale=scale, eps=eps),
        grid=(T // tt,),
        in_specs=[pl.BlockSpec((tt, B, E), lambda i: (i, 0, 0)),
                  pl.BlockSpec((E, 3 * E), lambda i: (0, 0)),
                  pl.BlockSpec((1, 3 * E), lambda i: (0, 0)),
                  pl.BlockSpec((E, E), lambda i: (0, 0)),
                  pl.BlockSpec((1, E), lambda i: (0, 0)),
                  pl.BlockSpec((1, E), lambda i: (0, 0)),
                  pl.BlockSpec((1, E), lambda i: (0, 0))],
        out_specs=pl.BlockSpec((tt, B, E), lambda i: (i, 0, 0)),
        out_shape=jax.ShapeDtypeStruct((T, B, E), jnp.float32),
        compiler_params=pltpu.CompilerParams(
            dimension_semantics=("parallel",),
            vmem_limit_bytes=_VMEM_LIMIT),
    )(y, wqkv, bqkv, wo, bo, g, beta)


def _ffn_layer_kernel(y_ref, w1_ref, b1_ref, w2_ref, b2_ref, g_ref, beta_ref,
                      o_ref, *, eps):
    y = y_ref[...]                                    # (tm, E) fp32
    h = jnp.dot(y.astype(jnp.bfloat16), w1_ref[...],
                preferred_element_type=jnp.float32) + b1_ref[...]
    h = jnp.maximum(h, 0.0)
    f = jnp.dot(h.astype(jnp.bfloat16), w2_ref[...],
                preferred_element_type=jnp.float32) + b2_ref[...]
    x = y + f
    mean = jnp.mean(x, axis=-1, keepdims=True)
    xc = x - mean
    var = jnp.mean(xc * xc, axis=-1, keepdims=True)
    o_ref[...] = (xc * jax.lax.rsqrt(var + eps) * g_ref[...]
                  + beta_ref[...]).astype(o_ref.dtype)


def ffn_layer(y2d, layer, eps=1e-5):
    """Fused lin1 + relu + lin2 + residual + LayerNorm2 over row tiles of (T*B, E)."""
    M, E = y2d.shape
    F = layer["lin1_w"].shape[0]
    tm = _pick_tile(M, 256, 8)
    w1 = layer["lin1_w"].T.astype(jnp.bfloat16)       # (E, F)
    b1 = layer["lin1_b"].reshape(1, F).astype(jnp.float32)
    w2 = layer["lin2_w"].T.astype(jnp.bfloat16)       # (F, E)
    b2 = layer["lin2_b"].reshape(1, E).astype(jnp.float32)
    g = layer["norm2_g"].reshape(1, E).astype(jnp.float32)
    beta = layer["norm2_b"].reshape(1, E).astype(jnp.float32)
    return pl.pallas_call(
        functools.partial(_ffn_layer_kernel, eps=eps),
        grid=(M // tm,),
        in_specs=[pl.BlockSpec((tm, E), lambda i: (i, 0)),
                  pl.BlockSpec((E, F), lambda i: (0, 0)),
                  pl.BlockSpec((1, F), lambda i: (0, 0)),
                  pl.BlockSpec((F, E), lambda i: (0, 0)),
                  pl.BlockSpec((1, E), lambda i: (0, 0)),
                  pl.BlockSpec((1, E), lambda i: (0, 0)),
                  pl.BlockSpec((1, E), lambda i: (0, 0))],
        out_specs=pl.BlockSpec((tm, E), lambda i: (i, 0)),
        out_shape=jax.ShapeDtypeStruct((M, E), jnp.float32),
        compiler_params=pltpu.CompilerParams(
            dimension_semantics=("parallel",),
            vmem_limit_bytes=_VMEM_LIMIT),
    )(y2d, w1, b1, w2, b2, g, beta)


# ----------------------------------------------------------------------------
# Fused mean-over-time + final fc (pipelined reduction over T)
# ----------------------------------------------------------------------------
def _mean_fc_kernel(y_ref, w_ref, b_ref, o_ref, acc_ref, *, n_t):
    t = pl.program_id(0)

    @pl.when(t == 0)
    def _():
        acc_ref[...] = jnp.zeros_like(acc_ref)

    acc_ref[...] += jnp.dot(y_ref[0], w_ref[...],
                            preferred_element_type=jnp.float32)

    @pl.when(t == n_t - 1)
    def _():
        o_ref[...] = acc_ref[...] * (1.0 / n_t) + b_ref[...]


def mean_fc(y, fc_w_t, fc_b):
    """(1/T) * sum_t y_t @ W + b  ==  fc(mean_over_time(y)). y: (T, B, E)."""
    T, B, E = y.shape
    O = fc_w_t.shape[1]
    return pl.pallas_call(
        functools.partial(_mean_fc_kernel, n_t=T),
        grid=(T,),
        in_specs=[pl.BlockSpec((1, B, E), lambda t: (t, 0, 0)),
                  pl.BlockSpec((E, O), lambda t: (0, 0)),
                  pl.BlockSpec((1, O), lambda t: (0, 0))],
        out_specs=pl.BlockSpec((B, O), lambda t: (0, 0)),
        out_shape=jax.ShapeDtypeStruct((B, O), jnp.float32),
        scratch_shapes=[pltpu.VMEM((B, O), jnp.float32)],
        compiler_params=pltpu.CompilerParams(
            dimension_semantics=("arbitrary",)),
    )(y, fc_w_t.astype(jnp.float32), fc_b.reshape(1, O).astype(jnp.float32))


# ----------------------------------------------------------------------------
# Model forward
# ----------------------------------------------------------------------------
def bilstm_transformer_forward(params, x):
    B, T, D = x.shape
    H = params["hidden_dim"]
    E = 2 * H
    nhead = params["num_heads"]
    dh = E // nhead

    # One small (B,T,D)->(T,B,D) transpose of the raw input; everything downstream is
    # time-major so no large activation transposes/reversals happen at the XLA level.
    x_tb = jnp.transpose(x, (1, 0, 2)).reshape(T * B, D).astype(jnp.float32)

    # ---- BiLSTM ----  (fp32 input projections; b_ih + b_hh folded in)
    xp_f = matmul_bias(x_tb, params["w_ih_f"].T,
                       params["b_ih_f"] + params["b_hh_f"]).reshape(T, B, 4 * H)
    xp_b = matmul_bias(x_tb, params["w_ih_b"].T,
                       params["b_ih_b"] + params["b_hh_b"]).reshape(T, B, 4 * H)
    h_f, h_b = bilstm(xp_f, xp_b, params["w_hh_f"].T, params["w_hh_b"].T, H)
    # TODO(synk): with H < 128 the per-direction stores / this concat are lane-masked;
    # pad H to a 128 multiple at production sizes to make them lane-dense.
    y = jnp.concatenate([h_f, h_b], axis=-1)                       # (T, B, E)

    # ---- TransformerEncoder (seq axis == B, batch axis == T, post-norm, relu) ----
    scale = 1.0 / math.sqrt(dh)
    for layer in params["layers"]:
        y = mha_layer(y, layer, nhead=nhead, dh=dh, scale=scale)   # (T, B, E)
        y = ffn_layer(y.reshape(T * B, E), layer).reshape(T, B, E)

    # self.dropout_layer: identity at inference.
    return mean_fc(y, params["fc_w"].T, params["fc_b"])            # (B, out_dim)


# ----------------------------------------------------------------------------
# Pure-JAX reference (for correctness check)
# ----------------------------------------------------------------------------
def reference_forward(params, x):
    B, T, D = x.shape
    H = params["hidden_dim"]
    E = 2 * H
    nhead = params["num_heads"]
    dh = E // nhead

    def lstm_dir(xs, w_ih, w_hh, b_ih, b_hh):
        def step(carry, xt):
            h, c = carry
            gates = xt @ w_ih.T + b_ih + h @ w_hh.T + b_hh
            i, f, g, o = jnp.split(gates, 4, axis=-1)
            i, f, o = jax.nn.sigmoid(i), jax.nn.sigmoid(f), jax.nn.sigmoid(o)
            g = jnp.tanh(g)
            c = f * c + i * g
            h = o * jnp.tanh(c)
            return (h, c), h
        h0 = jnp.zeros((B, H), jnp.float32)
        c0 = jnp.zeros((B, H), jnp.float32)
        _, hs = jax.lax.scan(step, (h0, c0), xs.transpose(1, 0, 2))
        return hs.transpose(1, 0, 2)

    hf = lstm_dir(x, params["w_ih_f"], params["w_hh_f"],
                  params["b_ih_f"], params["b_hh_f"])
    hb = lstm_dir(x[:, ::-1], params["w_ih_b"], params["w_hh_b"],
                  params["b_ih_b"], params["b_hh_b"])[:, ::-1]
    y = jnp.concatenate([hf, hb], axis=-1)

    def layernorm(z, g, b, eps=1e-5):
        m = z.mean(-1, keepdims=True)
        v = ((z - m) ** 2).mean(-1, keepdims=True)
        return (z - m) / jnp.sqrt(v + eps) * g + b

    for layer in params["layers"]:
        yf = y.reshape(B * T, E)
        qkv = yf @ layer["in_proj_w"].T + layer["in_proj_b"]
        q, k, v = jnp.split(qkv, 3, axis=-1)
        heads = lambda z: z.reshape(B, T, nhead, dh).transpose(1, 2, 0, 3)
        qh, kh, vh = heads(q), heads(k), heads(v)
        s = jnp.einsum('thqd,thkd->thqk', qh, kh) / (float(dh) ** 0.5)
        p = jax.nn.softmax(s, axis=-1)
        o = jnp.einsum('thqk,thkd->thqd', p, vh).transpose(2, 0, 1, 3).reshape(B * T, E)
        o = o @ layer["out_proj_w"].T + layer["out_proj_b"]
        y1 = layernorm(yf + o, layer["norm1_g"], layer["norm1_b"])
        ff = jnp.maximum(y1 @ layer["lin1_w"].T + layer["lin1_b"], 0.0)
        ff = ff @ layer["lin2_w"].T + layer["lin2_b"]
        y = layernorm(y1 + ff, layer["norm2_g"], layer["norm2_b"]).reshape(B, T, E)

    ctx = y.mean(axis=1)
    return ctx @ params["fc_w"].T + params["fc_b"]


# ----------------------------------------------------------------------------
# Deterministic parameter init (shapes match the PyTorch module)
# ----------------------------------------------------------------------------
def init_params(key, input_dim, hidden_dim, output_dim, num_heads, num_layers,
                dim_feedforward=2048):
    E = 2 * hidden_dim
    keys = iter(jax.random.split(key, 64))

    def u(shape, fan):
        bound = 1.0 / math.sqrt(fan)
        return jax.random.uniform(next(keys), shape, jnp.float32, -bound, bound)

    params = dict(hidden_dim=hidden_dim, num_heads=num_heads)
    for suf in ("f", "b"):
        params[f"w_ih_{suf}"] = u((4 * hidden_dim, input_dim), hidden_dim)
        params[f"w_hh_{suf}"] = u((4 * hidden_dim, hidden_dim), hidden_dim)
        params[f"b_ih_{suf}"] = u((4 * hidden_dim,), hidden_dim)
        params[f"b_hh_{suf}"] = u((4 * hidden_dim,), hidden_dim)

    layers = []
    for _ in range(num_layers):
        layers.append(dict(
            in_proj_w=u((3 * E, E), E), in_proj_b=u((3 * E,), E),
            out_proj_w=u((E, E), E), out_proj_b=u((E,), E),
            lin1_w=u((dim_feedforward, E), E), lin1_b=u((dim_feedforward,), E),
            lin2_w=u((E, dim_feedforward), dim_feedforward),
            lin2_b=u((E,), dim_feedforward),
            norm1_g=jnp.ones((E,), jnp.float32),
            norm1_b=jnp.zeros((E,), jnp.float32),
            norm2_g=jnp.ones((E,), jnp.float32),
            norm2_b=jnp.zeros((E,), jnp.float32),
        ))
    params["layers"] = layers
    params["fc_w"] = u((output_dim, E), E)
    params["fc_b"] = u((output_dim,), E)
    return params


if __name__ == "__main__":
    B, T = 2, 8
    input_dim, hidden_dim, output_dim = 16, 32, 5
    num_heads, num_layers = 4, 2

    key = jax.random.PRNGKey(0)
    kx, kp = jax.random.split(key)
    x = jax.random.normal(kx, (B, T, input_dim), jnp.float32)
    params = init_params(kp, input_dim, hidden_dim, output_dim,
                         num_heads, num_layers)

    out = jax.block_until_ready(bilstm_transformer_forward(params, x))
    assert out.shape == (B, output_dim)

    with jax.default_matmul_precision("highest"):
        ref = jax.block_until_ready(reference_forward(params, x))
    err = float(jnp.max(jnp.abs(out - ref)))
    # Transformer matmuls use bf16 MXU inputs (fp32 accumulation), so the tolerance
    # vs. the pure-fp32 reference is looser than before.
    assert err < 3e-2, f"mismatch vs reference: {err}"

    print("KERNEL_OK")
</pallas_src>

<mosaic_0001>
module attributes {stable_mosaic.version = 11 : i64} {
  func.func @_matmul_bias_kernel(%arg0: i32, %arg1: i32, %arg2: i32, %arg3: memref<16x16xf32, #tpu.memory_space<vmem>>, %arg4: memref<16x128xf32, #tpu.memory_space<vmem>>, %arg5: memref<1x128xf32, #tpu.memory_space<vmem>>, %arg6: memref<16x128xf32, #tpu.memory_space<vmem>>, %arg7: memref<16x128xf32, #tpu.memory_space<vmem>>) attributes {dimension_semantics = [#tpu.dimension_semantics<parallel>, #tpu.dimension_semantics<parallel>, #tpu.dimension_semantics<arbitrary>], iteration_bounds = array<i64: 1, 1, 1>, scalar_prefetch = 0 : i64, scratch_operands = 1 : i64, tpu.core_type = #tpu.core_type<tc>, window_params = [{transform_indices = @transform_0, window_bounds = array<i64: 16, 16>}, {transform_indices = @transform_1, window_bounds = array<i64: 16, 128>}, {transform_indices = @transform_2, window_bounds = array<i64: 1, 128>}, {transform_indices = @transform_3, window_bounds = array<i64: 16, 128>}]} {
    %c0_i32 = arith.constant 0 : i32
    %0 = arith.cmpi eq, %arg2, %c0_i32 : i32
    %1 = arith.extui %0 : i1 to i32
    %c0_i32_0 = arith.constant 0 : i32
    %2 = arith.cmpi ne, %1, %c0_i32_0 : i32
    scf.if %2 {
      %cst_10 = arith.constant 0.000000e+00 : f32
      %12 = vector.broadcast %cst_10 : f32 to vector<16x128xf32>
      %c0_11 = arith.constant 0 : index
      %c0_12 = arith.constant 0 : index
      %13 = vector.load %arg7[%c0_11, %c0_12] : memref<16x128xf32, #tpu.memory_space<vmem>>, vector<16x128xf32>
      tpu.vector_store %arg7[%c0_11, %c0_12], %12 {strides = array<i32>} : memref<16x128xf32, #tpu.memory_space<vmem>>, vector<16x128xf32>,
    } else {
    }
    %c0 = arith.constant 0 : index
    %c0_1 = arith.constant 0 : index
    %3 = vector.load %arg7[%c0, %c0_1] : memref<16x128xf32, #tpu.memory_space<vmem>>, vector<16x128xf32>
    %c0_2 = arith.constant 0 : index
    %c0_3 = arith.constant 0 : index
    %4 = vector.load %arg3[%c0_2, %c0_3] : memref<16x16xf32, #tpu.memory_space<vmem>>, vector<16x16xf32>
    %c0_4 = arith.constant 0 : index
    %c0_5 = arith.constant 0 : index
    %5 = vector.load %arg4[%c0_4, %c0_5] : memref<16x128xf32, #tpu.memory_space<vmem>>, vector<16x128xf32>
    %cst = arith.constant dense<0.000000e+00> : vector<16x128xf32>
    %6 = tpu.matmul %4, %5, %cst {dimension_numbers = #tpu.dot_dimension_numbers<[1], [0], [0], [1], [0, 0, 1, 1], [], []>} : vector<16x16xf32>, vector<16x128xf32>, vector<16x128xf32> -> vector<16x128xf32>
    %7 = arith.addf %3, %6 : vector<16x128xf32>
    %c0_6 = arith.constant 0 : index
    %c0_7 = arith.constant 0 : index
    %8 = vector.load %arg7[%c0_6, %c0_7] : memref<16x128xf32, #tpu.memory_space<vmem>>, vector<16x128xf32>
    tpu.vector_store %arg7[%c0_6, %c0_7], %7 {strides = array<i32>} : memref<16x128xf32, #tpu.memory_space<vmem>>, vector<16x128xf32>,
    %c0_i32_8 = arith.constant 0 : i32
    %9 = arith.cmpi eq, %arg2, %c0_i32_8 : i32
    %10 = arith.extui %9 : i1 to i32
    %c0_i32_9 = arith.constant 0 : i32
    %11 = arith.cmpi ne, %10, %c0_i32_9 : i32
    scf.if %11 {
      %c0_10 = arith.constant 0 : index
      %c0_11 = arith.constant 0 : index
      %12 = vector.load %arg7[%c0_10, %c0_11] : memref<16x128xf32, #tpu.memory_space<vmem>>, vector<16x128xf32>
      %c0_12 = arith.constant 0 : index
      %c0_13 = arith.constant 0 : index
      %13 = vector.load %arg5[%c0_12, %c0_13] : memref<1x128xf32, #tpu.memory_space<vmem>>, vector<1x128xf32>
      %14 = vector.broadcast %13 : vector<1x128xf32> to vector<16x128xf32>
      %15 = arith.addf %12, %14 : vector<16x128xf32>
      %c0_14 = arith.constant 0 : index
      %c0_15 = arith.constant 0 : index
      %16 = vector.load %arg6[%c0_14, %c0_15] : memref<16x128xf32, #tpu.memory_space<vmem>>, vector<16x128xf32>
      tpu.vector_store %arg6[%c0_14, %c0_15], %15 {strides = array<i32>} : memref<16x128xf32, #tpu.memory_space<vmem>>, vector<16x128xf32>,
    } else {
    }
    return
  }
  func.func @transform_0(%arg0: i32, %arg1: i32, %arg2: i32) -> (i32, i32) {
    %c0_i32 = arith.constant 0 : i32
    return %arg0, %arg2 : i32, i32
  }
  func.func @transform_1(%arg0: i32, %arg1: i32, %arg2: i32) -> (i32, i32) {
    %c0_i32 = arith.constant 0 : i32
    return %arg2, %arg1 : i32, i32
  }
  func.func @transform_2(%arg0: i32, %arg1: i32, %arg2: i32) -> (i32, i32) {
    %c0_i32 = arith.constant 0 : i32
    %c0_i32_0 = arith.constant 0 : i32
    return %c0_i32, %arg1 : i32, i32
  }
  func.func @transform_3(%arg0: i32, %arg1: i32, %arg2: i32) -> (i32, i32) {
    %c0_i32 = arith.constant 0 : i32
    return %arg0, %arg1 : i32, i32
  }
}

</mosaic_0001>

<llo_original>
// kernel: tpu_custom_call.1
$region0: #{tpu_custom_call.1}
  #allocation0 [shape = 'u32[]', space=smem, size = 0x4, offset = 0x4, fixed_abs, tag = 'smem constant byte address 0x4 - core index']
  #allocation1 [shape = 'u32[144,128]{1,0:T(1,128)}', space=vmem, size = 0x12000, scoped, tag = 'internal scratch']
  #allocation2 [shape = 'f32[16,128]{1,0:T(8,128)}', space=vmem, size = 0x2000, scoped, tag = 'scratch operand']
  %s0 = inlined_call_operand.hbm [shape: f32[16,16], index: 0, kind: input, shape index: {}]
  %s1 = inlined_call_operand.hbm [shape: f32[16,128], index: 1, kind: input, shape index: {}]
  %s2 = inlined_call_operand.hbm [shape: f32[1,128], index: 2, kind: input, shape index: {}]
  %s3 = inlined_call_operand.hbm [shape: f32[16,128], index: 3, kind: output, shape index: {}]
  %s4 = sld [smem:[#allocation0]]
  $region42: #{tpu_custom_call.1} parent=0
    _
  %s6 = ssub.s32 1, %s4
  %s7 = scalar_select 0, %s6, %s4
  $region1: #{tpu_custom_call.1} parent=0
    #allocation3 [shape = 'u8[8192]{0}', space=vmem, size = 0x2000, scoped, tag = 'input window, operand 0, single buffered']
    #allocation4 [shape = 's32[1]{0}', space=sflag, size = 0x4, scoped, tag = 'scoped memory for tpu_custom_call.1']
    #allocation5 [shape = 's32[1]{0}', space=sflag, size = 0x4, scoped, tag = 'scoped memory for tpu_custom_call.1']
    #allocation6 [shape = 'u8[8192]{0}', space=vmem, size = 0x2000, scoped, tag = 'input window, operand 1, single buffered']
    #allocation7 [shape = 's32[1]{0}', space=sflag, size = 0x4, scoped, tag = 'scoped memory for tpu_custom_call.1']
    #allocation8 [shape = 'u8[512]{0}', space=vmem, size = 0x400, scoped, tag = 'input window, operand 2, single buffered']
    #allocation9 [shape = 'u8[8192]{0}', space=vmem, size = 0x2000, scoped, tag = 'output window, operand 0, single buffered']
    %8 = vsyncpa [#allocation4], 0
    %9 = vsyncpa [#allocation7], 0
    %10 = vsyncpa [#allocation5], 0
    // Predicated region
    $region2: #{tpu_custom_call.1} parent=1 // pred_check
      _
    $region3: #{tpu_custom_call.1} parent=1 // pred_check_branch
      %12 = sbr.rel (0) target = $region5
    $region4: #{tpu_custom_call.1} parent=1 // pred_region
      %s14 = ssub.s32 256, 256
      %15 = vsyncadd [#allocation4], %s14
      %s16 = sshll.u32 [#allocation3], 4
      %s17 = int_to_ptr.vmem [resolvable:$true] %s16
      %22 = dma.hbm_to_vmem [thread:$0]  %s0, 256, %s17, [#allocation4], 128, 128, 8
    $region5: #{tpu_custom_call.1} parent=1 // pred_fallthru
      _
    // Predicated region
    $region6: #{tpu_custom_call.1} parent=1 // pred_check
      _
    $region7: #{tpu_custom_call.1} parent=1 // pred_check_branch
      %24 = sbr.rel (0) target = $region9
    $region8: #{tpu_custom_call.1} parent=1 // pred_region
      %s26 = ssub.s32 256, 256
      %27 = vsyncadd [#allocation7], %s26
      %s28 = sshll.u32 [#allocation6], 4
      %s29 = int_to_ptr.vmem [resolvable:$true] %s28
      %34 = dma.hbm_to_vmem [thread:$0]  %s1, 256, %s29, [#allocation7], 128, 128, 8
    $region9: #{tpu_custom_call.1} parent=1 // pred_fallthru
      _
    // Predicated region
    $region10: #{tpu_custom_call.1} parent=1 // pred_check
      _
    $region11: #{tpu_custom_call.1} parent=1 // pred_check_branch
      %36 = sbr.rel (0) target = $region13
    $region12: #{tpu_custom_call.1} parent=1 // pred_region
      %s38 = ssub.s32 16, 16
      %39 = vsyncadd [#allocation7], %s38
      %s41 = sshll.u32 [#allocation8], 4
      %s42 = int_to_ptr.vmem [resolvable:$true] %s41
      %44 = dma.hbm_to_vmem [thread:$0]  %s2, 16, %s42, [#allocation7]
    $region13: #{tpu_custom_call.1} parent=1 // pred_fallthru
      _
    // Predicated region
    $region14: #{tpu_custom_call.1} parent=1 // pred_check
      _
    $region15: #{tpu_custom_call.1} parent=1 // pred_check_branch
      %46 = sbr.rel (0) target = $region17
    $region16: #{tpu_custom_call.1} parent=1 // pred_region
      %47 = dma.done [#allocation4], 256
    $region17: #{tpu_custom_call.1} parent=1 // pred_fallthru
      _
    // Predicated region
    $region18: #{tpu_custom_call.1} parent=1 // pred_check
      _
    $region19: #{tpu_custom_call.1} parent=1 // pred_check_branch
      %49 = sbr.rel (0) target = $region21
    $region20: #{tpu_custom_call.1} parent=1 // pred_region
      %50 = dma.done [#allocation7], 256
    $region21: #{tpu_custom_call.1} parent=1 // pred_fallthru
      _
    // Predicated region
    $region22: #{tpu_custom_call.1} parent=1 // pred_check
      _
    $region23: #{tpu_custom_call.1} parent=1 // pred_check_branch
      %52 = sbr.rel (0) target = $region25
    $region24: #{tpu_custom_call.1} parent=1 // pred_region
      %53 = dma.done [#allocation7], 16
    $region25: #{tpu_custom_call.1} parent=1 // pred_fallthru
      _
    %p54 = scmp.eq.s32.totalorder 0, 0
    // Predicated region
    $region26: #{tpu_custom_call.1} parent=1 // pred_check
      %p55 = pneg %p54
    $region27: #{tpu_custom_call.1} parent=1 // pred_check_branch
      %57 = sbr.rel (%p55) target = $region29
    $region28: #{tpu_custom_call.1} parent=1 // pred_region
      %58 = vst [vmem:[#allocation2] sm:$0xff] 0.0
      %59 = vst [vmem:[#allocation2 + $0x8] sm:$0xff] 0.0
    $region29: #{tpu_custom_call.1} parent=1 // pred_fallthru
      _
    %v60 = vld [vmem:[#allocation2] sm:$0xff]
    %v61 = vld [vmem:[#allocation2 + $0x8] sm:$0xff]
    %v62 = vld [vmem:[#allocation3] sm:$0xff]
    %v63 = vld [vmem:[#allocation3 + $0x8] sm:$0xff]
    %v64 = vld [vmem:[#allocation6] sm:$0xff]
    %v65 = vld [vmem:[#allocation6 + $0x8] sm:$0xff]
    %vm66 = vcmask 130048
    %v68 = vsel %vm66, %v62, 0
    %v71 = vsel %vm66, %v63, 0
    %73 = vmatprep.subr.mxu0 0.0
    %74 = vmatpush1.msra.mxu0 %v64
    %75 = vmatprep.subr.mxu0 0.0
    %76 = vmatpush1.msra.mxu0 %v65
    %77 = vmatprep.subr.mxu0 0.0
    %78 = vmatpush1.msra.mxu0 0.0
    %79 = vmatprep.subr.mxu0 0.0
    %80 = vmatpush1.msra.mxu0 0.0
    %81 = vmatprep.subr.mxu0 0.0
    %82 = vmatpush1.msra.mxu0 0.0
    %83 = vmatprep.subr.mxu0 0.0
    %84 = vmatpush1.msra.mxu0 0.0
    %85 = vmatprep.subr.mxu0 0.0
    %86 = vmatpush1.msra.mxu0 0.0
    %87 = vmatprep.subr.mxu0 0.0
    %88 = vmatpush1.msra.mxu0 0.0
    %89 = vmatprep.subr.mxu0 0.0
    %90 = vmatpush1.msra.mxu0 0.0
    %91 = vmatprep.subr.mxu0 0.0
    %92 = vmatpush1.msra.mxu0 0.0
    %93 = vmatprep.subr.mxu0 0.0
    %94 = vmatpush1.msra.mxu0 0.0
    %95 = vmatprep.subr.mxu0 0.0
    %96 = vmatpush1.msra.mxu0 0.0
    %97 = vmatprep.subr.mxu0 0.0
    %98 = vmatpush1.msra.mxu0 0.0
    %99 = vmatprep.subr.mxu0 0.0
    %100 = vmatpush1.msra.mxu0 0.0
    %101 = vmatprep.subr.mxu0 0.0
    %102 = vmatpush1.msra.mxu0 0.0
    %103 = vmatprep.subr.mxu0 0.0
    %104 = vmatpush1.msra.mxu0 0.0
    %105 = vmatprep.subr.mxu0 0.0
    %106 = vmatpush1.msra.mxu0 0.0
    %107 = vmatprep.subr.mxu0 0.0
    %108 = vmatpush1.msra.mxu0 0.0
    %109 = vmatprep.subr.mxu0 0.0
    %110 = vmatpush1.msra.mxu0 0.0
    %111 = vmatprep.subr.mxu0 0.0
    %112 = vmatpush1.msra.mxu0 0.0
    %113 = vmatprep.subr.mxu0 0.0
    %114 = vmatpush1.msra.mxu0 0.0
    %115 = vmatprep.subr.mxu0 0.0
    %116 = vmatpush1.msra.mxu0 0.0
    %117 = vmatprep.subr.mxu0 0.0
    %118 = vmatpush1.msra.mxu0 0.0
    %119 = vmatprep.subr.mxu0 0.0
    %120 = vmatpush1.msra.mxu0 0.0
    %121 = vmatprep.subr.mxu0 0.0
    %122 = vmatpush1.msra.mxu0 0.0
    %123 = vmatprep.subr.mxu0 0.0
    %124 = vmatpush1.msra.mxu0 0.0
    %125 = vmatprep.subr.mxu0 0.0
    %126 = vmatpush1.msra.mxu0 0.0
    %127 = vmatprep.subr.mxu0 0.0
    %128 = vmatpush1.msra.mxu0 0.0
    %129 = vmatprep.subr.mxu0 0.0
    %130 = vmatpush1.msra.mxu0 0.0
    %131 = vmatprep.subr.mxu0 0.0
    %132 = vmatpush1.msra.mxu0 0.0
    %133 = vmatprep.subr.mxu0 0.0
    %134 = vmatpush1.msra.mxu0 0.0
    %135 = vmatprep.subr.mxu0 0.0
    %136 = vmatpush1.msra.mxu0 0.0
    %137 = vmatprep.mubr.f32.mxu0 0.0
    %138 = vmatmul.mubr.f32.gmra.mrb[0].mxu0 %v68
    %v139 = vpop.f32.mrb[0].mxu0
    %v140 = vadd.f32 0.0, %v139
    %v141 = vpop.f32.mrb[0].mxu0
    %142 = vmatprep.mubr.f32.mxu0 0.0
    %143 = vmatmul.mubr.f32.gmra.mrb[0].mxu0 %v71
    %v144 = vpop.f32.mrb[0].mxu0
    %v145 = vadd.f32 0.0, %v144
    %v146 = vpop.f32.mrb[0].mxu0
    %147 = vdwg.mxu0
    %v148 = vadd.f32 %v60, %v140
    %v149 = vadd.f32 %v61, %v145
    %150 = vst [vmem:[#allocation2] sm:$0xff] %v148
    %151 = vst [vmem:[#allocation2 + $0x8] sm:$0xff] %v149
    // Predicated region
    $region30: #{tpu_custom_call.1} parent=1 // pred_check
      %p152 = pneg %p54
    $region31: #{tpu_custom_call.1} parent=1 // pred_check_branch
      %154 = sbr.rel (%p152) target = $region33
    $region32: #{tpu_custom_call.1} parent=1 // pred_region
      %v155 = vld [vmem:[#allocation2] sm:$0xff]
      %v156 = vld [vmem:[#allocation2 + $0x8] sm:$0xff]
      %v157 = vld [vmem:[#allocation8] sm:$0x1]
      %v159 = vlaneseq
      %v160 = vshrl.u32 %v159, 7
      %v161 = vsub.s32 0, %v160
      %v162 = vrot.slane %v157, %v161
      %v164 = vadd.f32 %v155, %v162
      %v165 = vadd.f32 %v156, %v162
      %166 = vst [vmem:[#allocation9] sm:$0xff] %v164
      %167 = vst [vmem:[#allocation9 + $0x8] sm:$0xff] %v165
    $region33: #{tpu_custom_call.1} parent=1 // pred_fallthru
      _
    // Predicated region
    $region34: #{tpu_custom_call.1} parent=1 // pred_check
      _
    $region35: #{tpu_custom_call.1} parent=1 // pred_check_branch
      %169 = sbr.rel (0) target = $region37
    $region36: #{tpu_custom_call.1} parent=1 // pred_region
      %s171 = ssub.s32 256, 256
      %172 = vsyncadd [#allocation5], %s171
      %s173 = sshll.u32 [#allocation9], 4
      %s174 = int_to_ptr.vmem [resolvable:$true] %s173
      %179 = dma.vmem_to_hbm [thread:$0]  %s174, 256, %s3, [#allocation5], 128, 128, 8
    $region37: #{tpu_custom_call.1} parent=1 // pred_fallthru
      _
    // Predicated region
    $region38: #{tpu_custom_call.1} parent=1 // pred_check
      _
    $region39: #{tpu_custom_call.1} parent=1 // pred_check_branch
      %181 = sbr.rel (0) target = $region41
    $region40: #{tpu_custom_call.1} parent=1 // pred_region
      %182 = dma.done [#allocation5], 256
    $region41: #{tpu_custom_call.1} parent=1 // pred_fallthru
      _
    %183 = vsyncpa [#allocation4], 1
    %184 = vsyncpa [#allocation7], 1
    %185 = vsyncpa [#allocation5], 1

</llo_original>
